<compile_context>
chip_gen: v7x
topology: tpu7x:2x2x1
jax: 0.10.0
libtpu: 0.0.40
codegen_flags: <defaults>
</compile_context>

<pallas_src>
import jax
import jax.numpy as jnp
from jax import lax
from jax.experimental import pallas as pl
from jax.experimental.pallas import tpu as pltpu

NEG_INF = -1e30  # large finite negative instead of -inf (avoids inf-inf NaN)


# ---------------------------------------------------------------------------
# Kernel 1: tiled Linear  y = x @ W_t + b   (W_t pre-transposed: (E_in, E_out))
# ---------------------------------------------------------------------------
def _linear_kernel(x_ref, wt_ref, b_ref, o_ref):
    acc = jnp.dot(x_ref[...], wt_ref[...], preferred_element_type=jnp.float32)
    o_ref[...] = (acc + b_ref[...].astype(jnp.float32)).astype(o_ref.dtype)


def pallas_linear(x2d, w_t, b, *, tm=256, tn=512):
    """x2d: (M, K); w_t: (K, N) (already transposed); b: (N,)."""
    M, K = x2d.shape
    K2, N = w_t.shape
    assert K == K2
    tm = M if M <= tm else tm            # small case: whole dim as one block
    tn = N if N <= tn else tn            # lane-dense (multiple of 128) when tiled
    grid = (pl.cdiv(M, tm), pl.cdiv(N, tn))
    return pl.pallas_call(
        _linear_kernel,
        out_shape=jax.ShapeDtypeStruct((M, N), x2d.dtype),
        grid=grid,
        in_specs=[
            pl.BlockSpec((tm, K), lambda i, j: (i, 0)),
            pl.BlockSpec((K, tn), lambda i, j: (0, j)),
            pl.BlockSpec((1, tn), lambda i, j: (0, j)),
        ],
        out_specs=pl.BlockSpec((tm, tn), lambda i, j: (i, j)),
        compiler_params=pltpu.CompilerParams(
            dimension_semantics=("parallel", "parallel")),
    )(x2d, w_t, b.reshape(1, -1))


# ---------------------------------------------------------------------------
# Kernel 2: flash-style attention over (batch*head) blocks with KV tiling.
#   softmax((q_scaled @ k^T) + bias) @ v   with online (streaming) softmax.
# ---------------------------------------------------------------------------
def _make_flash_kernel(src_len, tk, mask_tail):
    def kernel(q_ref, k_ref, v_ref, bias_ref, o_ref, m_sc, l_sc, acc_sc):
        ki = pl.program_id(2)

        @pl.when(ki == 0)
        def _():
            m_sc[...] = jnp.full_like(m_sc, -jnp.inf)
            l_sc[...] = jnp.zeros_like(l_sc)
            acc_sc[...] = jnp.zeros_like(acc_sc)

        q = q_ref[...]                      # (BH_BLK, TQ, hd)  (already scaled)
        k = k_ref[...]                      # (BH_BLK, TK, hd)
        v = v_ref[...]                      # (BH_BLK, TK, hd)

        # NT contraction: contract last dims, batch over BH -> no K transpose.
        s = lax.dot_general(q, k, (((2,), (2,)), ((0,), (0,))),
                            preferred_element_type=jnp.float32)  # (BH_BLK, TQ, TK)
        s = s + bias_ref[...][:, None, :].astype(jnp.float32)
        if mask_tail:  # only emitted when S % TK != 0 (mask padded KV columns)
            col = ki * tk + lax.broadcasted_iota(jnp.int32, s.shape, 2)
            s = jnp.where(col < src_len, s, NEG_INF)

        m_prev = m_sc[...]
        m_new = jnp.maximum(m_prev, jnp.max(s, axis=-1, keepdims=True))
        alpha = jnp.exp(m_prev - m_new)
        p = jnp.exp(s - m_new)
        l_sc[...] = alpha * l_sc[...] + jnp.sum(p, axis=-1, keepdims=True)
        acc_sc[...] = alpha * acc_sc[...] + lax.dot_general(
            p.astype(v.dtype), v, (((2,), (1,)), ((0,), (0,))),
            preferred_element_type=jnp.float32)
        m_sc[...] = m_new

        @pl.when(ki == pl.num_programs(2) - 1)
        def _():
            inv = pl.reciprocal(l_sc[...], approx=True)
            o_ref[...] = (acc_sc[...] * inv).astype(o_ref.dtype)

    return kernel


def pallas_attention(qh, kh, vh, bias_bh, *, bh_blk=8, tq=256, tk=512):
    """qh/kh/vh: (B*H, T|S, hd); bias_bh: (B*H, S) additive (0 / -1e30)."""
    BH, T, hd = qh.shape
    S = kh.shape[1]
    bh_blk = BH if BH <= bh_blk else bh_blk
    tq = T if T <= tq else tq
    tk = S if S <= tk else tk
    grid = (pl.cdiv(BH, bh_blk), pl.cdiv(T, tq), pl.cdiv(S, tk))
    mask_tail = (S % tk) != 0
    kernel = _make_flash_kernel(S, tk, mask_tail)
    return pl.pallas_call(
        kernel,
        out_shape=jax.ShapeDtypeStruct((BH, T, hd), qh.dtype),
        grid=grid,
        in_specs=[
            pl.BlockSpec((bh_blk, tq, hd), lambda b, qi, ki: (b, qi, 0)),
            pl.BlockSpec((bh_blk, tk, hd), lambda b, qi, ki: (b, ki, 0)),
            pl.BlockSpec((bh_blk, tk, hd), lambda b, qi, ki: (b, ki, 0)),
            pl.BlockSpec((bh_blk, tk), lambda b, qi, ki: (b, ki)),
        ],
        out_specs=pl.BlockSpec((bh_blk, tq, hd), lambda b, qi, ki: (b, qi, 0)),
        scratch_shapes=[
            pltpu.VMEM((bh_blk, tq, 1), jnp.float32),   # running max
            pltpu.VMEM((bh_blk, tq, 1), jnp.float32),   # running denom
            pltpu.VMEM((bh_blk, tq, hd), jnp.float32),  # output accumulator
        ],
        compiler_params=pltpu.CompilerParams(
            dimension_semantics=("parallel", "parallel", "arbitrary")),
    )(qh, kh, vh, bias_bh)


# ---------------------------------------------------------------------------
# Parameter prep (done once, host-side): fuse Q/K/V, fold scaling, transpose.
# ---------------------------------------------------------------------------
def prepare_params(params, num_heads, embed_dim):
    hd = embed_dim // num_heads
    scaling = hd ** (-0.5)
    w_qkv = jnp.concatenate(
        [params["wq"] * scaling, params["wk"], params["wv"]], axis=0)   # (3E, E)
    b_qkv = jnp.concatenate(
        [params["bq"] * scaling, params["bk"], params["bv"]])           # (3E,)
    return {
        "w_qkv_t": jnp.transpose(w_qkv),       # (E, 3E)  pre-transposed once
        "b_qkv": b_qkv,
        "wo_t": jnp.transpose(params["wo"]),   # (E, E)
        "bo": params["bo"],
    }


# ---------------------------------------------------------------------------
# SelfAttention forward (self-attention path, no cache, eval mode)
# ---------------------------------------------------------------------------
def self_attention_forward(query, key_padding_mask, prepped, num_heads):
    T, B, E = query.shape
    hd = E // num_heads
    x2d = query.reshape(T * B, E)

    qkv = pallas_linear(x2d, prepped["w_qkv_t"], prepped["b_qkv"])   # (T*B, 3E)
    q2d, k2d, v2d = qkv[:, :E], qkv[:, E:2 * E], qkv[:, 2 * E:]

    # _shape: (T, B, E) -> (T, B*H, hd) -> (B*H, T, hd)
    # TODO(synk): these XLA transposes could be folded into the attention
    # BlockSpecs ((T, B*H, hd) layout) to save two activation HBM round trips.
    def shape_heads(t):
        return t.reshape(T, B * num_heads, hd).transpose(1, 0, 2)

    qh, kh, vh = shape_heads(q2d), shape_heads(k2d), shape_heads(v2d)
    S = kh.shape[1]
    assert key_padding_mask.shape == (B, S)

    # Additive mask bias: 0 where valid, -1e30 where padded; one row per head.
    bias_b = jnp.where(key_padding_mask, NEG_INF, 0.0).astype(query.dtype)  # (B, S)
    bias_bh = jnp.repeat(bias_b, num_heads, axis=0)                          # (B*H, S)

    attn = pallas_attention(qh, kh, vh, bias_bh)                  # (B*H, T, hd)

    attn2d = attn.transpose(1, 0, 2).reshape(T * B, E)            # (T*B, E)
    out = pallas_linear(attn2d, prepped["wo_t"], prepped["bo"])
    return out.reshape(T, B, E)


# ---------------------------------------------------------------------------
# Pure-JAX reference (mirrors the PyTorch forward, eval, no cache/attn_mask)
# ---------------------------------------------------------------------------
def ref_forward(query, key_padding_mask, params, num_heads):
    T, B, E = query.shape
    hd = E // num_heads
    scaling = hd ** (-0.5)

    def lin(x, w, b):
        return x @ w.T + b

    q = lin(query, params["wq"], params["bq"]) * scaling
    k = lin(query, params["wk"], params["bk"])
    v = lin(query, params["wv"], params["bv"])

    def shape_heads(t):
        return t.reshape(T, B * num_heads, hd).transpose(1, 0, 2)

    q, k, v = shape_heads(q), shape_heads(k), shape_heads(v)
    aw = jnp.einsum("btd,bsd->bts", q, k)                         # (B*H, T, S)
    aw = aw.reshape(B, num_heads, T, T)
    aw = jnp.where(key_padding_mask[:, None, None, :], -jnp.inf, aw)
    aw = aw.reshape(B * num_heads, T, T)
    aw = jax.nn.softmax(aw, axis=-1)
    out = jnp.einsum("bts,bsd->btd", aw, v)
    out = out.transpose(1, 0, 2).reshape(T, B, E)
    return lin(out, params["wo"], params["bo"])


if __name__ == "__main__":
    # Small shapes: seq=8, batch=2, embed=32, heads=4 (head_dim=8)
    tgt_len, bsz, embed_dim, num_heads = 8, 2, 32, 4

    key = jax.random.PRNGKey(0)
    ks = jax.random.split(key, 10)

    def init_w(k):
        return jax.random.normal(k, (embed_dim, embed_dim), jnp.float32) * 0.05

    def init_b(k):
        return jax.random.normal(k, (embed_dim,), jnp.float32) * 0.01

    params = {
        "wq": init_w(ks[0]), "bq": init_b(ks[1]),
        "wk": init_w(ks[2]), "bk": init_b(ks[3]),
        "wv": init_w(ks[4]), "bv": init_b(ks[5]),
        "wo": init_w(ks[6]), "bo": init_b(ks[7]),
    }

    query = jax.random.normal(ks[8], (tgt_len, bsz, embed_dim), jnp.float32)
    # key_padding_mask: True == padded. Batch 0: no padding; batch 1: last 2
    # positions padded (never a fully-masked row).
    key_padding_mask = jnp.zeros((bsz, tgt_len), dtype=bool)
    key_padding_mask = key_padding_mask.at[1, -2:].set(True)

    prepped = prepare_params(params, num_heads, embed_dim)

    out = self_attention_forward(query, key_padding_mask, prepped, num_heads)
    out = jax.block_until_ready(out)

    ref = ref_forward(query, key_padding_mask, params, num_heads)
    assert out.shape == (tgt_len, bsz, embed_dim)
    assert jnp.allclose(out, ref, rtol=2e-3, atol=2e-3), "mismatch vs reference"

    print("KERNEL_OK")
</pallas_src>

<mosaic_0001>
module attributes {stable_mosaic.version = 11 : i64} {
  func.func @_linear_kernel(%arg0: i32, %arg1: i32, %arg2: memref<16x32xf32, #tpu.memory_space<vmem>>, %arg3: memref<32x96xf32, #tpu.memory_space<vmem>>, %arg4: memref<1x96xf32, #tpu.memory_space<vmem>>, %arg5: memref<16x96xf32, #tpu.memory_space<vmem>>) attributes {dimension_semantics = [#tpu.dimension_semantics<parallel>, #tpu.dimension_semantics<parallel>], iteration_bounds = array<i64: 1, 1>, scalar_prefetch = 0 : i64, scratch_operands = 0 : i64, tpu.core_type = #tpu.core_type<tc>, window_params = [{transform_indices = @transform_0, window_bounds = array<i64: 16, 32>}, {transform_indices = @transform_1, window_bounds = array<i64: 32, 96>}, {transform_indices = @transform_2, window_bounds = array<i64: 1, 96>}, {transform_indices = @transform_3, window_bounds = array<i64: 16, 96>}]} {
    %c0 = arith.constant 0 : index
    %c0_0 = arith.constant 0 : index
    %0 = vector.load %arg2[%c0, %c0_0] : memref<16x32xf32, #tpu.memory_space<vmem>>, vector<16x32xf32>
    %c0_1 = arith.constant 0 : index
    %c0_2 = arith.constant 0 : index
    %1 = vector.load %arg3[%c0_1, %c0_2] : memref<32x96xf32, #tpu.memory_space<vmem>>, vector<32x96xf32>
    %cst = arith.constant dense<0.000000e+00> : vector<16x96xf32>
    %2 = tpu.matmul %0, %1, %cst {dimension_numbers = #tpu.dot_dimension_numbers<[1], [0], [0], [1], [0, 0, 1, 1], [], []>} : vector<16x32xf32>, vector<32x96xf32>, vector<16x96xf32> -> vector<16x96xf32>
    %c0_3 = arith.constant 0 : index
    %c0_4 = arith.constant 0 : index
    %3 = vector.load %arg4[%c0_3, %c0_4] : memref<1x96xf32, #tpu.memory_space<vmem>>, vector<1x96xf32>
    %4 = vector.broadcast %3 : vector<1x96xf32> to vector<16x96xf32>
    %5 = arith.addf %2, %4 : vector<16x96xf32>
    %c0_5 = arith.constant 0 : index
    %c0_6 = arith.constant 0 : index
    %6 = vector.load %arg5[%c0_5, %c0_6] : memref<16x96xf32, #tpu.memory_space<vmem>>, vector<16x96xf32>
    tpu.vector_store %arg5[%c0_5, %c0_6], %5 {strides = array<i32>} : memref<16x96xf32, #tpu.memory_space<vmem>>, vector<16x96xf32>,
    return
  }
  func.func @transform_0(%arg0: i32, %arg1: i32) -> (i32, i32) {
    %c0_i32 = arith.constant 0 : i32
    %c0_i32_0 = arith.constant 0 : i32
    return %arg0, %c0_i32 : i32, i32
  }
  func.func @transform_1(%arg0: i32, %arg1: i32) -> (i32, i32) {
    %c0_i32 = arith.constant 0 : i32
    %c0_i32_0 = arith.constant 0 : i32
    return %c0_i32, %arg1 : i32, i32
  }
  func.func @transform_2(%arg0: i32, %arg1: i32) -> (i32, i32) {
    %c0_i32 = arith.constant 0 : i32
    %c0_i32_0 = arith.constant 0 : i32
    return %c0_i32, %arg1 : i32, i32
  }
  func.func @transform_3(%arg0: i32, %arg1: i32) -> (i32, i32) {
    %c0_i32 = arith.constant 0 : i32
    return %arg0, %arg1 : i32, i32
  }
}

</mosaic_0001>

<llo_original>
// kernel: tpu_custom_call.1
$region0: #{tpu_custom_call.1}
  #allocation0 [shape = 'u32[]', space=smem, size = 0x4, offset = 0x4, fixed_abs, tag = 'smem constant byte address 0x4 - core index']
  #allocation1 [shape = 'u32[144,128]{1,0:T(1,128)}', space=vmem, size = 0x12000, scoped, tag = 'internal scratch']
  %s0 = inlined_call_operand.hbm [shape: f32[16,32], index: 0, kind: input, shape index: {}]
  %s1 = inlined_call_operand.hbm [shape: f32[32,96], index: 1, kind: input, shape index: {}]
  %s2 = inlined_call_operand.vmem [shape: f32[1,96], index: 2, kind: input, shape index: {}]
  %s3 = inlined_call_operand.hbm [shape: f32[16,96], index: 3, kind: output, shape index: {}]
  %s4 = sld [smem:[#allocation0]]
  $region30: #{tpu_custom_call.1} parent=0
    _
  %s6 = ssub.s32 1, %s4
  %s7 = scalar_select 0, %s6, %s4
  $region1: #{tpu_custom_call.1} parent=0
    #allocation2 [shape = 'u8[8192]{0}', space=vmem, size = 0x2000, scoped, tag = 'input window, operand 0, single buffered']
    #allocation3 [shape = 's32[1]{0}', space=sflag, size = 0x4, scoped, tag = 'scoped memory for tpu_custom_call.1']
    #allocation4 [shape = 's32[1]{0}', space=sflag, size = 0x4, scoped, tag = 'scoped memory for tpu_custom_call.1']
    #allocation5 [shape = 'u8[16384]{0}', space=vmem, size = 0x4000, scoped, tag = 'input window, operand 1, single buffered']
    #allocation6 [shape = 's32[1]{0}', space=sflag, size = 0x4, scoped, tag = 'scoped memory for tpu_custom_call.1']
    #allocation7 [shape = 'u8[8192]{0}', space=vmem, size = 0x2000, scoped, tag = 'output window, operand 0, single buffered']
    %8 = vsyncpa [#allocation3], 0
    %9 = vsyncpa [#allocation6], 0
    %10 = vsyncpa [#allocation4], 0
    // Predicated region
    $region2: #{tpu_custom_call.1} parent=1 // pred_check
      _
    $region3: #{tpu_custom_call.1} parent=1 // pred_check_branch
      %12 = sbr.rel (0) target = $region5
    $region4: #{tpu_custom_call.1} parent=1 // pred_region
      %s14 = ssub.s32 256, 256
      %15 = vsyncadd [#allocation3], %s14
      %s16 = sshll.u32 [#allocation2], 4
      %s17 = int_to_ptr.vmem [resolvable:$true] %s16
      %22 = dma.hbm_to_vmem [thread:$0]  %s0, 256, %s17, [#allocation3], 128, 128, 8
    $region5: #{tpu_custom_call.1} parent=1 // pred_fallthru
      _
    // Predicated region
    $region6: #{tpu_custom_call.1} parent=1 // pred_check
      _
    $region7: #{tpu_custom_call.1} parent=1 // pred_check_branch
      %24 = sbr.rel (0) target = $region9
    $region8: #{tpu_custom_call.1} parent=1 // pred_region
      %s26 = ssub.s32 512, 512
      %27 = vsyncadd [#allocation6], %s26
      %s28 = sshll.u32 [#allocation5], 4
      %s29 = int_to_ptr.vmem [resolvable:$true] %s28
      %34 = dma.hbm_to_vmem [thread:$0]  %s1, 512, %s29, [#allocation6], 128, 128, 8
    $region9: #{tpu_custom_call.1} parent=1 // pred_fallthru
      _
    // Predicated region
    $region10: #{tpu_custom_call.1} parent=1 // pred_check
      _
    $region11: #{tpu_custom_call.1} parent=1 // pred_check_branch
      %36 = sbr.rel (0) target = $region13
    $region12: #{tpu_custom_call.1} parent=1 // pred_region
      _
    $region13: #{tpu_custom_call.1} parent=1 // pred_fallthru
      _
    // Predicated region
    $region14: #{tpu_custom_call.1} parent=1 // pred_check
      _
    $region15: #{tpu_custom_call.1} parent=1 // pred_check_branch
      %38 = sbr.rel (0) target = $region17
    $region16: #{tpu_custom_call.1} parent=1 // pred_region
      %39 = dma.done [#allocation3], 256
    $region17: #{tpu_custom_call.1} parent=1 // pred_fallthru
      _
    // Predicated region
    $region18: #{tpu_custom_call.1} parent=1 // pred_check
      _
    $region19: #{tpu_custom_call.1} parent=1 // pred_check_branch
      %41 = sbr.rel (0) target = $region21
    $region20: #{tpu_custom_call.1} parent=1 // pred_region
      %42 = dma.done [#allocation6], 512
    $region21: #{tpu_custom_call.1} parent=1 // pred_fallthru
      _
    %v43 = vld [vmem:[#allocation2] sm:$0xff]
    %v44 = vld [vmem:[#allocation2 + $0x8] sm:$0xff]
    %v45 = vld [vmem:[#allocation5] sm:$0xff]
    %v46 = vld [vmem:[#allocation5 + $0x8] sm:$0xff]
    %v47 = vld [vmem:[#allocation5 + $0x10] sm:$0xff]
    %v48 = vld [vmem:[#allocation5 + $0x18] sm:$0xff]
    %v49 = vld [vmem:[%s2] sm:$0x1]
    %v51 = vlaneseq
    %v52 = vshrl.u32 %v51, 7
    %v53 = vsub.s32 0, %v52
    %v54 = vrot.slane %v49, %v53
    %vm56 = vcmask 261120
    %v58 = vsel %vm56, %v43, 0
    %v61 = vsel %vm56, %v44, 0
    %63 = vmatprep.subr.mxu0 0.0
    %64 = vmatpush1.msra.mxu0 %v45
    %65 = vmatprep.subr.mxu0 0.0
    %66 = vmatpush1.msra.mxu0 %v46
    %67 = vmatprep.subr.mxu0 0.0
    %68 = vmatpush1.msra.mxu0 %v47
    %69 = vmatprep.subr.mxu0 0.0
    %70 = vmatpush1.msra.mxu0 %v48
    %71 = vmatprep.subr.mxu0 0.0
    %72 = vmatpush1.msra.mxu0 0.0
    %73 = vmatprep.subr.mxu0 0.0
    %74 = vmatpush1.msra.mxu0 0.0
    %75 = vmatprep.subr.mxu0 0.0
    %76 = vmatpush1.msra.mxu0 0.0
    %77 = vmatprep.subr.mxu0 0.0
    %78 = vmatpush1.msra.mxu0 0.0
    %79 = vmatprep.subr.mxu0 0.0
    %80 = vmatpush1.msra.mxu0 0.0
    %81 = vmatprep.subr.mxu0 0.0
    %82 = vmatpush1.msra.mxu0 0.0
    %83 = vmatprep.subr.mxu0 0.0
    %84 = vmatpush1.msra.mxu0 0.0
    %85 = vmatprep.subr.mxu0 0.0
    %86 = vmatpush1.msra.mxu0 0.0
    %87 = vmatprep.subr.mxu0 0.0
    %88 = vmatpush1.msra.mxu0 0.0
    %89 = vmatprep.subr.mxu0 0.0
    %90 = vmatpush1.msra.mxu0 0.0
    %91 = vmatprep.subr.mxu0 0.0
    %92 = vmatpush1.msra.mxu0 0.0
    %93 = vmatprep.subr.mxu0 0.0
    %94 = vmatpush1.msra.mxu0 0.0
    %95 = vmatprep.subr.mxu0 0.0
    %96 = vmatpush1.msra.mxu0 0.0
    %97 = vmatprep.subr.mxu0 0.0
    %98 = vmatpush1.msra.mxu0 0.0
    %99 = vmatprep.subr.mxu0 0.0
    %100 = vmatpush1.msra.mxu0 0.0
    %101 = vmatprep.subr.mxu0 0.0
    %102 = vmatpush1.msra.mxu0 0.0
    %103 = vmatprep.subr.mxu0 0.0
    %104 = vmatpush1.msra.mxu0 0.0
    %105 = vmatprep.subr.mxu0 0.0
    %106 = vmatpush1.msra.mxu0 0.0
    %107 = vmatprep.subr.mxu0 0.0
    %108 = vmatpush1.msra.mxu0 0.0
    %109 = vmatprep.subr.mxu0 0.0
    %110 = vmatpush1.msra.mxu0 0.0
    %111 = vmatprep.subr.mxu0 0.0
    %112 = vmatpush1.msra.mxu0 0.0
    %113 = vmatprep.subr.mxu0 0.0
    %114 = vmatpush1.msra.mxu0 0.0
    %115 = vmatprep.subr.mxu0 0.0
    %116 = vmatpush1.msra.mxu0 0.0
    %117 = vmatprep.subr.mxu0 0.0
    %118 = vmatpush1.msra.mxu0 0.0
    %119 = vmatprep.subr.mxu0 0.0
    %120 = vmatpush1.msra.mxu0 0.0
    %121 = vmatprep.subr.mxu0 0.0
    %122 = vmatpush1.msra.mxu0 0.0
    %123 = vmatprep.subr.mxu0 0.0
    %124 = vmatpush1.msra.mxu0 0.0
    %125 = vmatprep.subr.mxu0 0.0
    %126 = vmatpush1.msra.mxu0 0.0
    %127 = vmatprep.mubr.f32.mxu0 0.0
    %128 = vmatmul.mubr.f32.gmra.mrb[0].mxu0 %v58
    %v129 = vpop.f32.mrb[0].mxu0
    %v130 = vadd.f32 %v54, %v129
    %v131 = vpop.f32.mrb[0].mxu0
    %132 = vmatprep.mubr.f32.mxu0 0.0
    %133 = vmatmul.mubr.f32.gmra.mrb[0].mxu0 %v61
    %v134 = vpop.f32.mrb[0].mxu0
    %v135 = vadd.f32 %v54, %v134
    %v136 = vpop.f32.mrb[0].mxu0
    %137 = vdwg.mxu0
    %vm138 = vcmask 785408
    %139 = vst.msk [vmem:[#allocation7] sm:$0xff] %vm138, %v130
    %140 = vst.msk [vmem:[#allocation7 + $0x8] sm:$0xff] %vm138, %v135
    // Predicated region
    $region22: #{tpu_custom_call.1} parent=1 // pred_check
      _
    $region23: #{tpu_custom_call.1} parent=1 // pred_check_branch
      %142 = sbr.rel (0) target = $region25
    $region24: #{tpu_custom_call.1} parent=1 // pred_region
      %s144 = ssub.s32 256, 256
      %145 = vsyncadd [#allocation4], %s144
      %s146 = sshll.u32 [#allocation7], 4
      %s147 = int_to_ptr.vmem [resolvable:$true] %s146
      %152 = dma.vmem_to_hbm [thread:$0]  %s147, 256, %s3, [#allocation4], 128, 128, 8
    $region25: #{tpu_custom_call.1} parent=1 // pred_fallthru
      _
    // Predicated region
    $region26: #{tpu_custom_call.1} parent=1 // pred_check
      _
    $region27: #{tpu_custom_call.1} parent=1 // pred_check_branch
      %154 = sbr.rel (0) target = $region29
    $region28: #{tpu_custom_call.1} parent=1 // pred_region
      %155 = dma.done [#allocation4], 256
    $region29: #{tpu_custom_call.1} parent=1 // pred_fallthru
      _
    %156 = vsyncpa [#allocation3], 1
    %157 = vsyncpa [#allocation6], 1
    %158 = vsyncpa [#allocation4], 1

</llo_original>
